<compile_context>
chip_gen: v7x
topology: tpu7x:2x2x1
jax: 0.10.0
libtpu: 0.0.40
codegen_flags: <defaults>
</compile_context>

<pallas_src>
import jax
import jax.numpy as jnp
from jax.experimental import pallas as pl
from jax.experimental.pallas import tpu as pltpu

# ----------------------------- configuration --------------------------------
TIME_STEP = 19
FEATURE_NUM = 8            # == OUTPUT_CHANNEL so the residual add (skip + x) is valid
OUTPUT_CHANNEL = 8
NUM_BLOCKS = 1
NUM_LAYERS = 2
KERNEL_SIZE = 2
BATCH = 2

DILATIONS = tuple(2 ** i for _ in range(NUM_BLOCKS) for i in range(NUM_LAYERS))
L = len(DILATIONS)
RECEPTIVE_FIELD = 1 + (KERNEL_SIZE - 1) * NUM_BLOCKS * sum(2 ** k for k in range(NUM_LAYERS))
OUTPUT_WIDTH = TIME_STEP - RECEPTIVE_FIELD + 1
MAX_PAD = (KERNEL_SIZE - 1) * max(DILATIONS)        # causal pad kept per sample segment
SEG = TIME_STEP + MAX_PAD                           # per-sample lane segment width

assert OUTPUT_WIDTH - 1 == 15, "Linear(15, 1) requires output_width == 16"
assert FEATURE_NUM == OUTPUT_CHANNEL, "residual add (skip + x) needs feature_num == output_channel"


# --------------------------- small lane-shift helpers ------------------------
def _shift_right_zero(x, s):
    """out[:, i] = x[:, i - s], zero-filled (causal lane shift; sub-vreg slice+concat)."""
    if s == 0:
        return x
    return jnp.concatenate(
        [jnp.zeros((x.shape[0], s), x.dtype), x[:, :x.shape[1] - s]], axis=1)


def _shift_left_one(x):
    """out[:, i] = x[:, i + 1], zero-filled at the end."""
    return jnp.concatenate([x[:, 1:], jnp.zeros((x.shape[0], 1), x.dtype)], axis=1)


# ------------------------------- kernel -------------------------------------
def wavenet_kernel(xp_ref, wfg_ref, bfg_ref, w1_ref, b1_ref, bnsp_ref, bnbp_ref,
                   wc1_ref, bc1_ref, wc2f_ref, wlinm_ref, tail_ref, out_ref):
    C, K = OUTPUT_CHANNEL, KERNEL_SIZE

    xp = xp_ref[...]                                  # (C, Wp): batch packed on lanes, pad lanes == 0
    skip_sum = jnp.zeros_like(xp)

    # stack of GatedResidualBlocks + BatchNorm (static unroll; L is tiny)
    for l, d in enumerate(DILATIONS):
        # K dilated causal taps, stacked on the channel (sublane) axis
        taps = [_shift_right_zero(xp, (K - 1 - j) * d) for j in range(K)]
        xstack = jnp.concatenate(taps, axis=0)        # (K*C, Wp)
        # fused filter+gate dilated conv: one (2C, K*C) @ (K*C, Wp) matmul per layer
        fg = jnp.dot(wfg_ref[l], xstack, preferred_element_type=jnp.float32) + bfg_ref[l]
        gated = fg[:C] * jax.nn.sigmoid(fg[C:])       # gated activation, (C, Wp)
        skip = jnp.dot(w1_ref[l], gated, preferred_element_type=jnp.float32) + b1_ref[l]
        skip_sum = skip_sum + skip                    # crop is applied later via wlinm
        # residual + eval-mode BatchNorm1d (folded); the pad-lane mask folded into
        # bnsp/bnbp keeps the causal pad lanes exactly zero for the next layer.
        xp = (skip + xp) * bnsp_ref[l] + bnbp_ref[l]

    # relu(conv_1_1(sum of skips)); Dropout == identity in eval mode
    y = jnp.maximum(
        jnp.dot(wc1_ref[...], skip_sum, preferred_element_type=jnp.float32) + bc1_ref[...],
        0.0)                                          # (C, Wp)

    # conv_1_2 (kernel_size=2, out_channels=1) as one (1, 2C) matmul on [y ; y(t+1)]
    ystack = jnp.concatenate([y, _shift_left_one(y)], axis=0)     # (2C, Wp)
    z = jnp.maximum(
        jnp.dot(wc2f_ref[...], ystack, preferred_element_type=jnp.float32) + tail_ref[0],
        0.0)                                          # (1, Wp)

    # Linear(15, 1) + relu + sigmoid; wlinm selects each sample's cropped 15-lane window
    lin = jnp.dot(z, wlinm_ref[...], preferred_element_type=jnp.float32) + tail_ref[1]
    out_ref[...] = jax.nn.sigmoid(jnp.maximum(lin, 0.0))          # single (1, B) store


# ------------------------------- wrapper -------------------------------------
def wavenet_forward(x, params):
    B = x.shape[0]
    C, T, K, P = OUTPUT_CHANNEL, TIME_STEP, KERNEL_SIZE, MAX_PAD
    OW, Tp = OUTPUT_WIDTH, SEG
    Wp = B * Tp

    wf, bf, wg, bg, w1, b1, bns, bnb, wc1, bc1, wc2, bc2, wlin, blin = params

    # ---------- wrapper-side packing (layout plumbing, shared weights) ----------
    # fused filter/gate weights: rows [wf ; wg], columns are the K dilated taps
    wfg = jnp.concatenate(
        [jnp.concatenate([wf[:, j] for j in range(K)], axis=-1),   # (L, C, K*C)
         jnp.concatenate([wg[:, j] for j in range(K)], axis=-1)],  # (L, C, K*C)
        axis=1)                                                    # (L, 2C, K*C)
    bfg = jnp.concatenate([bf, bg], axis=1)                        # (L, 2C, 1)

    # BN scale/shift with the causal-pad lane mask folded in (pad lanes stay exactly 0)
    lane = jnp.arange(Wp)
    mask = ((lane % Tp) >= P).astype(jnp.float32).reshape(1, 1, Wp)
    bnsp = bns * mask                                              # (L, C, Wp)
    bnbp = bnb * mask                                              # (L, C, Wp)

    # conv_1_2 folded to a single (1, 2C) matmul against [y ; y shifted left by 1]
    wc2f = jnp.concatenate([wc2[:, 0], wc2[:, 1]], axis=0).reshape(1, 2 * C)

    # Linear(15, 1) as a (Wp, B) lane-segment matmul: per-sample crop + reduction
    col = jnp.zeros((Tp,), jnp.float32).at[P + T - OW:P + T - 1].set(wlin[0])
    wlinm = jnp.zeros((Wp, B), jnp.float32)
    for b in range(B):
        wlinm = wlinm.at[b * Tp:(b + 1) * Tp, b].set(col)

    tail = jnp.stack([bc2[0, 0], blin[0, 0]]).astype(jnp.float32)  # SMEM scalars

    # batch folded into the lane axis: (B, C, T) -> (C, B*(P+T)), causal pad per sample
    xp = jnp.pad(jnp.transpose(x, (1, 0, 2)), ((0, 0), (0, 0), (P, 0))).reshape(C, Wp)

    # ------------------------------ pallas_call ---------------------------------
    def fullspec(a):
        nd = a.ndim
        return pl.BlockSpec(a.shape, lambda i, nd=nd: (0,) * nd)

    vmem_args = (xp, wfg, bfg, w1, b1, bnsp, bnbp, wc1, bc1, wc2f, wlinm)
    in_specs = [fullspec(a) for a in vmem_args]
    in_specs.append(pl.BlockSpec(memory_space=pltpu.MemorySpace.SMEM))   # tail scalars

    out = pl.pallas_call(
        wavenet_kernel,
        out_shape=jax.ShapeDtypeStruct((1, B), jnp.float32),
        grid=(1,),                                   # whole batch in one invocation
        in_specs=in_specs,
        out_specs=pl.BlockSpec((1, B), lambda i: (0, 0)),
        compiler_params=pltpu.CompilerParams(dimension_semantics=("arbitrary",)),
    )(*vmem_args, tail)
    return out.reshape(-1, 1)                        # .view(-1, 1)


# ------------------------ deterministic parameter init -----------------------
def init_params(key):
    ks = jax.random.split(key, 14)
    C, K = OUTPUT_CHANNEL, KERNEL_SIZE

    def rnd(k, shape, scale=0.3):
        return jax.random.normal(k, shape, jnp.float32) * scale

    wf = rnd(ks[0], (L, K, C, C));  bf = rnd(ks[1], (L, C, 1), 0.1)     # conv_f per layer
    wg = rnd(ks[2], (L, K, C, C));  bg = rnd(ks[3], (L, C, 1), 0.1)     # conv_g per layer
    w1 = rnd(ks[4], (L, C, C));     b1 = rnd(ks[5], (L, C, 1), 0.1)     # 1x1 residual conv
    gamma = 1.0 + rnd(ks[6], (L, C, 1), 0.05)
    beta = rnd(ks[7], (L, C, 1), 0.05)
    run_mean = jnp.zeros((L, C, 1), jnp.float32)
    run_var = jnp.ones((L, C, 1), jnp.float32)
    eps = 1e-5
    bns = gamma / jnp.sqrt(run_var + eps)                                # folded BN scale
    bnb = beta - run_mean * bns                                          # folded BN shift
    wc1 = rnd(ks[8], (C, C));   bc1 = rnd(ks[9], (C, 1), 0.1)            # conv_1_1
    wc2 = rnd(ks[10], (C, 2));  bc2 = rnd(ks[11], (1, 1), 0.1)           # conv_1_2
    wlin = rnd(ks[12], (1, 15)); blin = rnd(ks[13], (1, 1), 0.1)         # Linear(15,1)
    return (wf, bf, wg, bg, w1, b1, bns, bnb, wc1, bc1, wc2, bc2, wlin, blin)


# ------------------------------ pure-JAX reference ---------------------------
def ref_forward(x, params):
    wf, bf, wg, bg, w1, b1, bns, bnb, wc1, bc1, wc2, bc2, wlin, blin = params
    C, T, OW, K = OUTPUT_CHANNEL, TIME_STEP, OUTPUT_WIDTH, KERNEL_SIZE

    def single(h):
        skip_sum = jnp.zeros((C, OW), jnp.float32)
        for l, d in enumerate(DILATIONS):
            pad = d * (K - 1)
            xp = jnp.concatenate([jnp.zeros((C, pad), jnp.float32), h], axis=1)
            f = jnp.broadcast_to(bf[l], (C, T))
            g = jnp.broadcast_to(bg[l], (C, T))
            for j in range(K):
                sl = xp[:, j * d: j * d + T]
                f = f + wf[l, j] @ sl
                g = g + wg[l, j] @ sl
            gated = f * jax.nn.sigmoid(g)
            skip = w1[l] @ gated + b1[l]
            res = skip + h
            h = res * bns[l] + bnb[l]
            skip_sum = skip_sum + skip[:, T - OW:]
        y = jnp.maximum(wc1 @ skip_sum + bc1, 0.0)
        z = jnp.sum(wc2[:, 0:1] * y[:, :OW - 1] + wc2[:, 1:2] * y[:, 1:OW],
                    axis=0, keepdims=True) + bc2[0, 0]
        z = jnp.maximum(z, 0.0)
        lin = jnp.maximum(jnp.sum(z * wlin) + blin[0, 0], 0.0)
        return jax.nn.sigmoid(lin)

    return jax.vmap(single)(x).reshape(-1, 1)


# --------------------------------- main ---------------------------------------
if __name__ == "__main__":
    key = jax.random.PRNGKey(0)
    kx, kp = jax.random.split(key)
    x = jax.random.normal(kx, (BATCH, FEATURE_NUM, TIME_STEP), jnp.float32)
    params = init_params(kp)

    fwd = jax.jit(wavenet_forward)
    out = jax.block_until_ready(fwd(x, params))

    ref = jax.block_until_ready(ref_forward(x, params))
    assert out.shape == (BATCH, 1), out.shape
    assert jnp.allclose(out, ref, rtol=1e-3, atol=1e-3), (out, ref)
    print("KERNEL_OK")
</pallas_src>

<mosaic_0001>
module attributes {stable_mosaic.version = 11 : i64} {
  func.func @wavenet_kernel(%arg0: i32, %arg1: memref<8x42xf32, #tpu.memory_space<vmem>>, %arg2: memref<2x16x16xf32, #tpu.memory_space<vmem>>, %arg3: memref<2x16x1xf32, #tpu.memory_space<vmem>>, %arg4: memref<2x8x8xf32, #tpu.memory_space<vmem>>, %arg5: memref<2x8x1xf32, #tpu.memory_space<vmem>>, %arg6: memref<2x8x42xf32, #tpu.memory_space<vmem>>, %arg7: memref<2x8x42xf32, #tpu.memory_space<vmem>>, %arg8: memref<8x8xf32, #tpu.memory_space<vmem>>, %arg9: memref<8x1xf32, #tpu.memory_space<vmem>>, %arg10: memref<1x16xf32, #tpu.memory_space<vmem>>, %arg11: memref<42x2xf32, #tpu.memory_space<vmem>>, %arg12: memref<2xf32, #tpu.memory_space<smem>>, %arg13: memref<1x2xf32, #tpu.memory_space<vmem>>) attributes {dimension_semantics = [#tpu.dimension_semantics<arbitrary>], iteration_bounds = array<i64: 1>, scalar_prefetch = 0 : i64, scratch_operands = 0 : i64, tpu.core_type = #tpu.core_type<tc>, window_params = [{pipeline_mode = #tpu.pipeline_mode<synchronous>, transform_indices = @transform_0, window_bounds = array<i64: 8, 42>}, {pipeline_mode = #tpu.pipeline_mode<synchronous>, transform_indices = @transform_1, window_bounds = array<i64: 2, 16, 16>}, {pipeline_mode = #tpu.pipeline_mode<synchronous>, transform_indices = @transform_2, window_bounds = array<i64: 2, 16, 1>}, {pipeline_mode = #tpu.pipeline_mode<synchronous>, transform_indices = @transform_3, window_bounds = array<i64: 2, 8, 8>}, {pipeline_mode = #tpu.pipeline_mode<synchronous>, transform_indices = @transform_4, window_bounds = array<i64: 2, 8, 1>}, {pipeline_mode = #tpu.pipeline_mode<synchronous>, transform_indices = @transform_5, window_bounds = array<i64: 2, 8, 42>}, {pipeline_mode = #tpu.pipeline_mode<synchronous>, transform_indices = @transform_6, window_bounds = array<i64: 2, 8, 42>}, {pipeline_mode = #tpu.pipeline_mode<synchronous>, transform_indices = @transform_7, window_bounds = array<i64: 8, 8>}, {pipeline_mode = #tpu.pipeline_mode<synchronous>, transform_indices = @transform_8, window_bounds = array<i64: 8, 1>}, {pipeline_mode = #tpu.pipeline_mode<synchronous>, transform_indices = @transform_9, window_bounds = array<i64: 1, 16>}, {pipeline_mode = #tpu.pipeline_mode<synchronous>, transform_indices = @transform_10, window_bounds = array<i64: 42, 2>}, {transform_indices = @transform_11, window_bounds = array<i64: 2>}, {pipeline_mode = #tpu.pipeline_mode<synchronous>, transform_indices = @transform_12, window_bounds = array<i64: 1, 2>}]} {
    %c0 = arith.constant 0 : index
    %c0_0 = arith.constant 0 : index
    %0 = vector.load %arg1[%c0, %c0_0] : memref<8x42xf32, #tpu.memory_space<vmem>>, vector<8x42xf32>
    %cst = arith.constant 0.000000e+00 : f32
    %1 = vector.broadcast %cst : f32 to vector<8x42xf32>
    %cst_1 = arith.constant 0.000000e+00 : f32
    %2 = vector.broadcast %cst_1 : f32 to vector<8x1xf32>
    %3 = vector.extract_strided_slice %0 {offsets = [0, 0], sizes = [8, 41], strides = [1, 1]} : vector<8x42xf32> to vector<8x41xf32>
    %4 = tpu.concatenate %2, %3 in 1 : vector<8x1xf32>, vector<8x41xf32> -> vector<8x42xf32>
    %5 = tpu.concatenate %4, %0 in 0 : vector<8x42xf32>, vector<8x42xf32> -> vector<16x42xf32>
    %c0_2 = arith.constant 0 : index
    %c0_3 = arith.constant 0 : index
    %c0_4 = arith.constant 0 : index
    %6 = vector.load %arg2[%c0_2, %c0_3, %c0_4] : memref<2x16x16xf32, #tpu.memory_space<vmem>>, vector<1x16x16xf32>
    %7 = vector.shape_cast %6 : vector<1x16x16xf32> to vector<16x16xf32>
    %cst_5 = arith.constant dense<0.000000e+00> : vector<16x42xf32>
    %8 = tpu.matmul %7, %5, %cst_5 {dimension_numbers = #tpu.dot_dimension_numbers<[1], [0], [0], [1], [0, 0, 1, 1], [], []>} : vector<16x16xf32>, vector<16x42xf32>, vector<16x42xf32> -> vector<16x42xf32>
    %c0_6 = arith.constant 0 : index
    %c0_7 = arith.constant 0 : index
    %c0_8 = arith.constant 0 : index
    %9 = vector.load %arg3[%c0_6, %c0_7, %c0_8] : memref<2x16x1xf32, #tpu.memory_space<vmem>>, vector<1x16x1xf32>
    %10 = vector.shape_cast %9 : vector<1x16x1xf32> to vector<16x1xf32>
    %11 = vector.broadcast %10 : vector<16x1xf32> to vector<16x42xf32>
    %12 = arith.addf %8, %11 : vector<16x42xf32>
    %13 = vector.extract_strided_slice %12 {offsets = [0, 0], sizes = [8, 42], strides = [1, 1]} : vector<16x42xf32> to vector<8x42xf32>
    %14 = vector.extract_strided_slice %12 {offsets = [8, 0], sizes = [8, 42], strides = [1, 1]} : vector<16x42xf32> to vector<8x42xf32>
    %15 = arith.negf %14 : vector<8x42xf32>
    %16 = math.exp %15 : vector<8x42xf32>
    %cst_9 = arith.constant 1.000000e+00 : f32
    %17 = vector.broadcast %cst_9 : f32 to vector<8x42xf32>
    %18 = arith.addf %17, %16 : vector<8x42xf32>
    %19 = arith.divf %17, %18 : vector<8x42xf32>
    %20 = arith.mulf %13, %19 : vector<8x42xf32>
    %c0_10 = arith.constant 0 : index
    %c0_11 = arith.constant 0 : index
    %c0_12 = arith.constant 0 : index
    %21 = vector.load %arg4[%c0_10, %c0_11, %c0_12] : memref<2x8x8xf32, #tpu.memory_space<vmem>>, vector<1x8x8xf32>
    %22 = vector.shape_cast %21 : vector<1x8x8xf32> to vector<8x8xf32>
    %cst_13 = arith.constant dense<0.000000e+00> : vector<8x42xf32>
    %23 = tpu.matmul %22, %20, %cst_13 {dimension_numbers = #tpu.dot_dimension_numbers<[1], [0], [0], [1], [0, 0, 1, 1], [], []>} : vector<8x8xf32>, vector<8x42xf32>, vector<8x42xf32> -> vector<8x42xf32>
    %c0_14 = arith.constant 0 : index
    %c0_15 = arith.constant 0 : index
    %c0_16 = arith.constant 0 : index
    %24 = vector.load %arg5[%c0_14, %c0_15, %c0_16] : memref<2x8x1xf32, #tpu.memory_space<vmem>>, vector<1x8x1xf32>
    %25 = vector.shape_cast %24 : vector<1x8x1xf32> to vector<8x1xf32>
    %26 = vector.broadcast %25 : vector<8x1xf32> to vector<8x42xf32>
    %27 = arith.addf %23, %26 : vector<8x42xf32>
    %28 = arith.addf %1, %27 : vector<8x42xf32>
    %29 = arith.addf %27, %0 : vector<8x42xf32>
    %c0_17 = arith.constant 0 : index
    %c0_18 = arith.constant 0 : index
    %c0_19 = arith.constant 0 : index
    %30 = vector.load %arg6[%c0_17, %c0_18, %c0_19] : memref<2x8x42xf32, #tpu.memory_space<vmem>>, vector<1x8x42xf32>
    %31 = vector.shape_cast %30 : vector<1x8x42xf32> to vector<8x42xf32>
    %32 = arith.mulf %29, %31 : vector<8x42xf32>
    %c0_20 = arith.constant 0 : index
    %c0_21 = arith.constant 0 : index
    %c0_22 = arith.constant 0 : index
    %33 = vector.load %arg7[%c0_20, %c0_21, %c0_22] : memref<2x8x42xf32, #tpu.memory_space<vmem>>, vector<1x8x42xf32>
    %34 = vector.shape_cast %33 : vector<1x8x42xf32> to vector<8x42xf32>
    %35 = arith.addf %32, %34 : vector<8x42xf32>
    %cst_23 = arith.constant 0.000000e+00 : f32
    %36 = vector.broadcast %cst_23 : f32 to vector<8x2xf32>
    %37 = vector.extract_strided_slice %35 {offsets = [0, 0], sizes = [8, 40], strides = [1, 1]} : vector<8x42xf32> to vector<8x40xf32>
    %38 = tpu.concatenate %36, %37 in 1 : vector<8x2xf32>, vector<8x40xf32> -> vector<8x42xf32>
    %39 = tpu.concatenate %38, %35 in 0 : vector<8x42xf32>, vector<8x42xf32> -> vector<16x42xf32>
    %c1 = arith.constant 1 : index
    %c0_24 = arith.constant 0 : index
    %c0_25 = arith.constant 0 : index
    %40 = vector.load %arg2[%c1, %c0_24, %c0_25] : memref<2x16x16xf32, #tpu.memory_space<vmem>>, vector<1x16x16xf32>
    %41 = vector.shape_cast %40 : vector<1x16x16xf32> to vector<16x16xf32>
    %cst_26 = arith.constant dense<0.000000e+00> : vector<16x42xf32>
    %42 = tpu.matmul %41, %39, %cst_26 {dimension_numbers = #tpu.dot_dimension_numbers<[1], [0], [0], [1], [0, 0, 1, 1], [], []>} : vector<16x16xf32>, vector<16x42xf32>, vector<16x42xf32> -> vector<16x42xf32>
    %c1_27 = arith.constant 1 : index
    %c0_28 = arith.constant 0 : index
    %c0_29 = arith.constant 0 : index
    %43 = vector.load %arg3[%c1_27, %c0_28, %c0_29] : memref<2x16x1xf32, #tpu.memory_space<vmem>>, vector<1x16x1xf32>
    %44 = vector.shape_cast %43 : vector<1x16x1xf32> to vector<16x1xf32>
    %45 = vector.broadcast %44 : vector<16x1xf32> to vector<16x42xf32>
    %46 = arith.addf %42, %45 : vector<16x42xf32>
    %47 = vector.extract_strided_slice %46 {offsets = [0, 0], sizes = [8, 42], strides = [1, 1]} : vector<16x42xf32> to vector<8x42xf32>
    %48 = vector.extract_strided_slice %46 {offsets = [8, 0], sizes = [8, 42], strides = [1, 1]} : vector<16x42xf32> to vector<8x42xf32>
    %49 = arith.negf %48 : vector<8x42xf32>
    %50 = math.exp %49 : vector<8x42xf32>
    %cst_30 = arith.constant 1.000000e+00 : f32
    %51 = vector.broadcast %cst_30 : f32 to vector<8x42xf32>
    %52 = arith.addf %51, %50 : vector<8x42xf32>
    %53 = arith.divf %51, %52 : vector<8x42xf32>
    %54 = arith.mulf %47, %53 : vector<8x42xf32>
    %c1_31 = arith.constant 1 : index
    %c0_32 = arith.constant 0 : index
    %c0_33 = arith.constant 0 : index
    %55 = vector.load %arg4[%c1_31, %c0_32, %c0_33] : memref<2x8x8xf32, #tpu.memory_space<vmem>>, vector<1x8x8xf32>
    %56 = vector.shape_cast %55 : vector<1x8x8xf32> to vector<8x8xf32>
    %cst_34 = arith.constant dense<0.000000e+00> : vector<8x42xf32>
    %57 = tpu.matmul %56, %54, %cst_34 {dimension_numbers = #tpu.dot_dimension_numbers<[1], [0], [0], [1], [0, 0, 1, 1], [], []>} : vector<8x8xf32>, vector<8x42xf32>, vector<8x42xf32> -> vector<8x42xf32>
    %c1_35 = arith.constant 1 : index
    %c0_36 = arith.constant 0 : index
    %c0_37 = arith.constant 0 : index
    %58 = vector.load %arg5[%c1_35, %c0_36, %c0_37] : memref<2x8x1xf32, #tpu.memory_space<vmem>>, vector<1x8x1xf32>
    %59 = vector.shape_cast %58 : vector<1x8x1xf32> to vector<8x1xf32>
    %60 = vector.broadcast %59 : vector<8x1xf32> to vector<8x42xf32>
    %61 = arith.addf %57, %60 : vector<8x42xf32>
    %62 = arith.addf %28, %61 : vector<8x42xf32>
    %c0_38 = arith.constant 0 : index
    %c0_39 = arith.constant 0 : index
    %63 = vector.load %arg8[%c0_38, %c0_39] : memref<8x8xf32, #tpu.memory_space<vmem>>, vector<8x8xf32>
    %cst_40 = arith.constant dense<0.000000e+00> : vector<8x42xf32>
    %64 = tpu.matmul %63, %62, %cst_40 {dimension_numbers = #tpu.dot_dimension_numbers<[1], [0], [0], [1], [0, 0, 1, 1], [], []>} : vector<8x8xf32>, vector<8x42xf32>, vector<8x42xf32> -> vector<8x42xf32>
    %c0_41 = arith.constant 0 : index
    %c0_42 = arith.constant 0 : index
    %65 = vector.load %arg9[%c0_41, %c0_42] : memref<8x1xf32, #tpu.memory_space<vmem>>, vector<8x1xf32>
    %66 = vector.broadcast %65 : vector<8x1xf32> to vector<8x42xf32>
    %67 = arith.addf %64, %66 : vector<8x42xf32>
    %cst_43 = arith.constant 0.000000e+00 : f32
    %68 = vector.broadcast %cst_43 : f32 to vector<8x42xf32>
    %69 = arith.maximumf %67, %68 : vector<8x42xf32>
    %70 = vector.extract_strided_slice %69 {offsets = [0, 1], sizes = [8, 41], strides = [1, 1]} : vector<8x42xf32> to vector<8x41xf32>
    %cst_44 = arith.constant 0.000000e+00 : f32
    %71 = vector.broadcast %cst_44 : f32 to vector<8x1xf32>
    %72 = tpu.concatenate %70, %71 in 1 : vector<8x41xf32>, vector<8x1xf32> -> vector<8x42xf32>
    %73 = tpu.concatenate %69, %72 in 0 : vector<8x42xf32>, vector<8x42xf32> -> vector<16x42xf32>
    %c0_45 = arith.constant 0 : index
    %c0_46 = arith.constant 0 : index
    %74 = vector.load %arg10[%c0_45, %c0_46] : memref<1x16xf32, #tpu.memory_space<vmem>>, vector<1x16xf32>
    %cst_47 = arith.constant dense<0.000000e+00> : vector<1x42xf32>
    %75 = tpu.matmul %74, %73, %cst_47 {dimension_numbers = #tpu.dot_dimension_numbers<[1], [0], [0], [1], [0, 0, 1, 1], [], []>} : vector<1x16xf32>, vector<16x42xf32>, vector<1x42xf32> -> vector<1x42xf32>
    %c0_48 = arith.constant 0 : index
    %76 = memref.load %arg12[%c0_48] : memref<2xf32, #tpu.memory_space<smem>>
    %77 = vector.broadcast %76 : f32 to vector<1x42xf32>
    %78 = arith.addf %75, %77 : vector<1x42xf32>
    %cst_49 = arith.constant 0.000000e+00 : f32
    %79 = vector.broadcast %cst_49 : f32 to vector<1x42xf32>
    %80 = arith.maximumf %78, %79 : vector<1x42xf32>
    %c0_50 = arith.constant 0 : index
    %c0_51 = arith.constant 0 : index
    %81 = vector.load %arg11[%c0_50, %c0_51] : memref<42x2xf32, #tpu.memory_space<vmem>>, vector<42x2xf32>
    %cst_52 = arith.constant dense<0.000000e+00> : vector<1x2xf32>
    %82 = tpu.matmul %80, %81, %cst_52 {dimension_numbers = #tpu.dot_dimension_numbers<[1], [0], [0], [1], [0, 0, 1, 1], [], []>} : vector<1x42xf32>, vector<42x2xf32>, vector<1x2xf32> -> vector<1x2xf32>
    %c1_53 = arith.constant 1 : index
    %83 = memref.load %arg12[%c1_53] : memref<2xf32, #tpu.memory_space<smem>>
    %84 = vector.broadcast %83 : f32 to vector<1x2xf32>
    %85 = arith.addf %82, %84 : vector<1x2xf32>
    %cst_54 = arith.constant 0.000000e+00 : f32
    %86 = vector.broadcast %cst_54 : f32 to vector<1x2xf32>
    %87 = arith.maximumf %85, %86 : vector<1x2xf32>
    %88 = arith.negf %87 : vector<1x2xf32>
    %89 = math.exp %88 : vector<1x2xf32>
    %cst_55 = arith.constant 1.000000e+00 : f32
    %90 = vector.broadcast %cst_55 : f32 to vector<1x2xf32>
    %91 = arith.addf %90, %89 : vector<1x2xf32>
    %92 = arith.divf %90, %91 : vector<1x2xf32>
    %c0_56 = arith.constant 0 : index
    %c0_57 = arith.constant 0 : index
    %93 = vector.load %arg13[%c0_56, %c0_57] : memref<1x2xf32, #tpu.memory_space<vmem>>, vector<1x2xf32>
    tpu.vector_store %arg13[%c0_56, %c0_57], %92 {strides = array<i32>} : memref<1x2xf32, #tpu.memory_space<vmem>>, vector<1x2xf32>,
    return
  }
  func.func @transform_0(%arg0: i32) -> (i32, i32) {
    %c0_i32 = arith.constant 0 : i32
    %c0_i32_0 = arith.constant 0 : i32
    %c0_i32_1 = arith.constant 0 : i32
    return %c0_i32, %c0_i32_0 : i32, i32
  }
  func.func @transform_1(%arg0: i32) -> (i32, i32, i32) {
    %c0_i32 = arith.constant 0 : i32
    %c0_i32_0 = arith.constant 0 : i32
    %c0_i32_1 = arith.constant 0 : i32
    %c0_i32_2 = arith.constant 0 : i32
    return %c0_i32, %c0_i32_0, %c0_i32_1 : i32, i32, i32
  }
  func.func @transform_2(%arg0: i32) -> (i32, i32, i32) {
    %c0_i32 = arith.constant 0 : i32
    %c0_i32_0 = arith.constant 0 : i32
    %c0_i32_1 = arith.constant 0 : i32
    %c0_i32_2 = arith.constant 0 : i32
    return %c0_i32, %c0_i32_0, %c0_i32_1 : i32, i32, i32
  }
  func.func @transform_3(%arg0: i32) -> (i32, i32, i32) {
    %c0_i32 = arith.constant 0 : i32
    %c0_i32_0 = arith.constant 0 : i32
    %c0_i32_1 = arith.constant 0 : i32
    %c0_i32_2 = arith.constant 0 : i32
    return %c0_i32, %c0_i32_0, %c0_i32_1 : i32, i32, i32
  }
  func.func @transform_4(%arg0: i32) -> (i32, i32, i32) {
    %c0_i32 = arith.constant 0 : i32
    %c0_i32_0 = arith.constant 0 : i32
    %c0_i32_1 = arith.constant 0 : i32
    %c0_i32_2 = arith.constant 0 : i32
    return %c0_i32, %c0_i32_0, %c0_i32_1 : i32, i32, i32
  }
  func.func @transform_5(%arg0: i32) -> (i32, i32, i32) {
    %c0_i32 = arith.constant 0 : i32
    %c0_i32_0 = arith.constant 0 : i32
    %c0_i32_1 = arith.constant 0 : i32
    %c0_i32_2 = arith.constant 0 : i32
    return %c0_i32, %c0_i32_0, %c0_i32_1 : i32, i32, i32
  }
  func.func @transform_6(%arg0: i32) -> (i32, i32, i32) {
    %c0_i32 = arith.constant 0 : i32
    %c0_i32_0 = arith.constant 0 : i32
    %c0_i32_1 = arith.constant 0 : i32
    %c0_i32_2 = arith.constant 0 : i32
    return %c0_i32, %c0_i32_0, %c0_i32_1 : i32, i32, i32
  }
  func.func @transform_7(%arg0: i32) -> (i32, i32) {
    %c0_i32 = arith.constant 0 : i32
    %c0_i32_0 = arith.constant 0 : i32
    %c0_i32_1 = arith.constant 0 : i32
    return %c0_i32, %c0_i32_0 : i32, i32
  }
  func.func @transform_8(%arg0: i32) -> (i32, i32) {
    %c0_i32 = arith.constant 0 : i32
    %c0_i32_0 = arith.constant 0 : i32
    %c0_i32_1 = arith.constant 0 : i32
    return %c0_i32, %c0_i32_0 : i32, i32
  }
  func.func @transform_9(%arg0: i32) -> (i32, i32) {
    %c0_i32 = arith.constant 0 : i32
    %c0_i32_0 = arith.constant 0 : i32
    %c0_i32_1 = arith.constant 0 : i32
    return %c0_i32, %c0_i32_0 : i32, i32
  }
  func.func @transform_10(%arg0: i32) -> (i32, i32) {
    %c0_i32 = arith.constant 0 : i32
    %c0_i32_0 = arith.constant 0 : i32
    %c0_i32_1 = arith.constant 0 : i32
    return %c0_i32, %c0_i32_0 : i32, i32
  }
  func.func @transform_11(%arg0: i32) -> i32 {
    %c0_i32 = arith.constant 0 : i32
    %c0_i32_0 = arith.constant 0 : i32
    return %c0_i32 : i32
  }
  func.func @transform_12(%arg0: i32) -> (i32, i32) {
    %c0_i32 = arith.constant 0 : i32
    %c0_i32_0 = arith.constant 0 : i32
    %c0_i32_1 = arith.constant 0 : i32
    return %c0_i32, %c0_i32_0 : i32, i32
  }
}

</mosaic_0001>

<llo_original>
// kernel: wavenet_forward.1
$region0: #{wavenet_forward.1}
  #allocation0 [shape = 'u32[]', space=smem, size = 0x4, offset = 0x4, fixed_abs, tag = 'smem constant byte address 0x4 - core index']
  #allocation1 [shape = 'u32[144,128]{1,0:T(1,128)}', space=vmem, size = 0x12000, scoped, tag = 'internal scratch']
  %s0 = inlined_call_operand.vmem [shape: f32[8,42], index: 0, kind: input, shape index: {}]
  %s1 = inlined_call_operand.vmem [shape: f32[2,16,16], index: 1, kind: input, shape index: {}]
  %s2 = inlined_call_operand.vmem [shape: f32[2,16,1], index: 2, kind: input, shape index: {}]
  %s3 = inlined_call_operand.vmem [shape: f32[2,8,8], index: 3, kind: input, shape index: {}]
  %s4 = inlined_call_operand.vmem [shape: f32[2,8,1], index: 4, kind: input, shape index: {}]
  %s5 = inlined_call_operand.vmem [shape: f32[2,8,42], index: 5, kind: input, shape index: {}]
  %s6 = inlined_call_operand.vmem [shape: f32[2,8,42], index: 6, kind: input, shape index: {}]
  %s7 = inlined_call_operand.vmem [shape: f32[8,8], index: 7, kind: input, shape index: {}]
  %s8 = inlined_call_operand.vmem [shape: f32[8,1], index: 8, kind: input, shape index: {}]
  %s9 = inlined_call_operand.vmem [shape: f32[1,16], index: 9, kind: input, shape index: {}]
  %s10 = inlined_call_operand.vmem [shape: f32[42,2], index: 10, kind: input, shape index: {}]
  %s11 = inlined_call_operand.vmem [shape: f32[2], index: 11, kind: input, shape index: {}]
  %s12 = inlined_call_operand.hbm [shape: f32[1,2], index: 12, kind: output, shape index: {}]
  %s13 = sld [smem:[#allocation0]]
  $region62: #{wavenet_forward.1} parent=0
    _
  %s15 = ssub.s32 1, %s13
  %s16 = scalar_select 0, %s15, %s13
  $region1: #{wavenet_forward.1} parent=0
    #allocation2 [shape = 'u8[512]{0}', space=smem, size = 0x200, scoped, tag = 'input window, operand 11, single buffered']
    #allocation3 [shape = 's32[1]{0}', space=sflag, size = 0x4, scoped, tag = 'scoped memory for wavenet_forward.1']
    #allocation4 [shape = 's32[1]{0}', space=sflag, size = 0x4, scoped, tag = 'scoped memory for wavenet_forward.1']
    #allocation5 [shape = 'u8[512]{0}', space=vmem, size = 0x400, scoped, tag = 'output window, operand 0, single buffered']
    %17 = vsyncpa [#allocation4], 0
    %18 = vsyncpa [#allocation3], 0
    // Predicated region
    $region2: #{wavenet_forward.1} parent=1 // pred_check
      _
    $region3: #{wavenet_forward.1} parent=1 // pred_check_branch
      %20 = sbr.rel (0) target = $region5
    $region4: #{wavenet_forward.1} parent=1 // pred_region
      _
    $region5: #{wavenet_forward.1} parent=1 // pred_fallthru
      _
    // Predicated region
    $region6: #{wavenet_forward.1} parent=1 // pred_check
      _
    $region7: #{wavenet_forward.1} parent=1 // pred_check_branch
      %22 = sbr.rel (0) target = $region9
    $region8: #{wavenet_forward.1} parent=1 // pred_region
      _
    $region9: #{wavenet_forward.1} parent=1 // pred_fallthru
      _
    // Predicated region
    $region10: #{wavenet_forward.1} parent=1 // pred_check
      _
    $region11: #{wavenet_forward.1} parent=1 // pred_check_branch
      %24 = sbr.rel (0) target = $region13
    $region12: #{wavenet_forward.1} parent=1 // pred_region
      _
    $region13: #{wavenet_forward.1} parent=1 // pred_fallthru
      _
    // Predicated region
    $region14: #{wavenet_forward.1} parent=1 // pred_check
      _
    $region15: #{wavenet_forward.1} parent=1 // pred_check_branch
      %26 = sbr.rel (0) target = $region17
    $region16: #{wavenet_forward.1} parent=1 // pred_region
      _
    $region17: #{wavenet_forward.1} parent=1 // pred_fallthru
      _
    // Predicated region
    $region18: #{wavenet_forward.1} parent=1 // pred_check
      _
    $region19: #{wavenet_forward.1} parent=1 // pred_check_branch
      %28 = sbr.rel (0) target = $region21
    $region20: #{wavenet_forward.1} parent=1 // pred_region
      _
    $region21: #{wavenet_forward.1} parent=1 // pred_fallthru
      _
    // Predicated region
    $region22: #{wavenet_forward.1} parent=1 // pred_check
      _
    $region23: #{wavenet_forward.1} parent=1 // pred_check_branch
      %30 = sbr.rel (0) target = $region25
    $region24: #{wavenet_forward.1} parent=1 // pred_region
      _
    $region25: #{wavenet_forward.1} parent=1 // pred_fallthru
      _
    // Predicated region
    $region26: #{wavenet_forward.1} parent=1 // pred_check
      _
    $region27: #{wavenet_forward.1} parent=1 // pred_check_branch
      %32 = sbr.rel (0) target = $region29
    $region28: #{wavenet_forward.1} parent=1 // pred_region
      _
    $region29: #{wavenet_forward.1} parent=1 // pred_fallthru
      _
    // Predicated region
    $region30: #{wavenet_forward.1} parent=1 // pred_check
      _
    $region31: #{wavenet_forward.1} parent=1 // pred_check_branch
      %34 = sbr.rel (0) target = $region33
    $region32: #{wavenet_forward.1} parent=1 // pred_region
      _
    $region33: #{wavenet_forward.1} parent=1 // pred_fallthru
      _
    // Predicated region
    $region34: #{wavenet_forward.1} parent=1 // pred_check
      _
    $region35: #{wavenet_forward.1} parent=1 // pred_check_branch
      %36 = sbr.rel (0) target = $region37
    $region36: #{wavenet_forward.1} parent=1 // pred_region
      _
    $region37: #{wavenet_forward.1} parent=1 // pred_fallthru
      _
    // Predicated region
    $region38: #{wavenet_forward.1} parent=1 // pred_check
      _
    $region39: #{wavenet_forward.1} parent=1 // pred_check_branch
      %38 = sbr.rel (0) target = $region41
    $region40: #{wavenet_forward.1} parent=1 // pred_region
      _
    $region41: #{wavenet_forward.1} parent=1 // pred_fallthru
      _
    // Predicated region
    $region42: #{wavenet_forward.1} parent=1 // pred_check
      _
    $region43: #{wavenet_forward.1} parent=1 // pred_check_branch
      %40 = sbr.rel (0) target = $region45
    $region44: #{wavenet_forward.1} parent=1 // pred_region
      _
    $region45: #{wavenet_forward.1} parent=1 // pred_fallthru
      _
    // Predicated region
    $region46: #{wavenet_forward.1} parent=1 // pred_check
      _
    $region47: #{wavenet_forward.1} parent=1 // pred_check_branch
      %42 = sbr.rel (0) target = $region49
    $region48: #{wavenet_forward.1} parent=1 // pred_region
      %s44 = ssub.s32 16, 16
      %45 = vsyncadd [#allocation4], %s44
      %s47 = sshll.u32 %s11, 4
      %s48 = int_to_ptr.vmem [resolvable:$true] %s47
      %50 = dma.vmem_to_smem %s48, 16, [#allocation2], [#allocation4]
    $region49: #{wavenet_forward.1} parent=1 // pred_fallthru
      _
    // Predicated region
    $region50: #{wavenet_forward.1} parent=1 // pred_check
      _
    $region51: #{wavenet_forward.1} parent=1 // pred_check_branch
      %52 = sbr.rel (0) target = $region53
    $region52: #{wavenet_forward.1} parent=1 // pred_region
      %53 = dma.done [#allocation4], 16
    $region53: #{wavenet_forward.1} parent=1 // pred_fallthru
      _
    %54 = sfence
    %v55 = vld [vmem:[%s0] sm:$0xff]
    %57 = vrot.lane.b32.xlu0 %v55, 1
    %v58 = vpop.permute.xlu0 %57
    %vm60 = vcmask 7168
    %v61 = vsel %vm60, 0.0, %v58
    %v62 = vld [vmem:[%s1] sm:$0xff]
    %v63 = vld [vmem:[%s1 + $0x8] sm:$0xff]
    %v64 = vld [vmem:[%s2] sm:$0xff]
    %v65 = vld [vmem:[%s2 + $0x8] sm:$0xff]
    %67 = vset.pattern.permute.xlu0 0
    %68 = vperm.xlu0 %67, %v64
    %v69 = vpop.permute.xlu0 %68
    %72 = vset.pattern.permute.xlu0 0
    %73 = vperm.xlu0 %72, %v65
    %v74 = vpop.permute.xlu0 %73
    %vm76 = vcmask 130048
    %v78 = vsel %vm76, %v62, 0
    %v81 = vsel %vm76, %v63, 0
    %83 = vmatprep.subr.mxu0 0.0
    %84 = vmatpush1.msra.mxu0 %v61
    %85 = vmatprep.subr.mxu0 0.0
    %86 = vmatpush1.msra.mxu0 %v55
    %87 = vmatprep.subr.mxu0 0.0
    %88 = vmatpush1.msra.mxu0 0.0
    %89 = vmatprep.subr.mxu0 0.0
    %90 = vmatpush1.msra.mxu0 0.0
    %91 = vmatprep.subr.mxu0 0.0
    %92 = vmatpush1.msra.mxu0 0.0
    %93 = vmatprep.subr.mxu0 0.0
    %94 = vmatpush1.msra.mxu0 0.0
    %95 = vmatprep.subr.mxu0 0.0
    %96 = vmatpush1.msra.mxu0 0.0
    %97 = vmatprep.subr.mxu0 0.0
    %98 = vmatpush1.msra.mxu0 0.0
    %99 = vmatprep.subr.mxu0 0.0
    %100 = vmatpush1.msra.mxu0 0.0
    %101 = vmatprep.subr.mxu0 0.0
    %102 = vmatpush1.msra.mxu0 0.0
    %103 = vmatprep.subr.mxu0 0.0
    %104 = vmatpush1.msra.mxu0 0.0
    %105 = vmatprep.subr.mxu0 0.0
    %106 = vmatpush1.msra.mxu0 0.0
    %107 = vmatprep.subr.mxu0 0.0
    %108 = vmatpush1.msra.mxu0 0.0
    %109 = vmatprep.subr.mxu0 0.0
    %110 = vmatpush1.msra.mxu0 0.0
    %111 = vmatprep.subr.mxu0 0.0
    %112 = vmatpush1.msra.mxu0 0.0
    %113 = vmatprep.subr.mxu0 0.0
    %114 = vmatpush1.msra.mxu0 0.0
    %115 = vmatprep.subr.mxu0 0.0
    %116 = vmatpush1.msra.mxu0 0.0
    %117 = vmatprep.subr.mxu0 0.0
    %118 = vmatpush1.msra.mxu0 0.0
    %119 = vmatprep.subr.mxu0 0.0
    %120 = vmatpush1.msra.mxu0 0.0
    %121 = vmatprep.subr.mxu0 0.0
    %122 = vmatpush1.msra.mxu0 0.0
    %123 = vmatprep.subr.mxu0 0.0
    %124 = vmatpush1.msra.mxu0 0.0
    %125 = vmatprep.subr.mxu0 0.0
    %126 = vmatpush1.msra.mxu0 0.0
    %127 = vmatprep.subr.mxu0 0.0
    %128 = vmatpush1.msra.mxu0 0.0
    %129 = vmatprep.subr.mxu0 0.0
    %130 = vmatpush1.msra.mxu0 0.0
    %131 = vmatprep.subr.mxu0 0.0
    %132 = vmatpush1.msra.mxu0 0.0
    %133 = vmatprep.subr.mxu0 0.0
    %134 = vmatpush1.msra.mxu0 0.0
    %135 = vmatprep.subr.mxu0 0.0
    %136 = vmatpush1.msra.mxu0 0.0
    %137 = vmatprep.subr.mxu0 0.0
    %138 = vmatpush1.msra.mxu0 0.0
    %139 = vmatprep.subr.mxu0 0.0
    %140 = vmatpush1.msra.mxu0 0.0
    %141 = vmatprep.subr.mxu0 0.0
    %142 = vmatpush1.msra.mxu0 0.0
    %143 = vmatprep.subr.mxu0 0.0
    %144 = vmatpush1.msra.mxu0 0.0
    %145 = vmatprep.subr.mxu0 0.0
    %146 = vmatpush1.msra.mxu0 0.0
    %147 = vmatprep.mubr.f32.mxu0 0.0
    %148 = vmatmul.mubr.f32.gmra.mrb[0].mxu0 %v78
    %v149 = vpop.f32.mrb[0].mxu0
    %v150 = vadd.f32 %v69, %v149
    %v151 = vpop.f32.mrb[0].mxu0
    %152 = vmatprep.mubr.f32.mxu0 0.0
    %153 = vmatmul.mubr.f32.gmra.mrb[0].mxu0 %v81
    %v154 = vpop.f32.mrb[0].mxu0
    %v155 = vadd.f32 %v74, %v154
    %v156 = vpop.f32.mrb[0].mxu0
    %157 = vdwg.mxu0
    %v158 = vxor.u32 %v155, 2147483648
    %v159 = vmul.f32 %v158, 1.442695
    %v160 = vpow.pop %v159
    %v161 = vadd.f32 %v160, 1.0
    %v162 = vrcp.pop %v161
    %v163 = vmul.f32 1.0, %v162
    %v164 = vmul.f32 %v150, %v163
    %v165 = vld [vmem:[%s3] sm:$0xff]
    %v166 = vld [vmem:[%s4] sm:$0xff]
    %168 = vset.pattern.permute.xlu0 0
    %169 = vperm.xlu0 %168, %v166
    %v170 = vpop.permute.xlu0 %169
    %vm172 = vcmask 64512
    %v174 = vsel %vm172, %v165, 0
    %176 = vmatprep.subr.mxu0 0.0
    %177 = vmatpush1.msra.mxu0 %v164
    %178 = vmatprep.subr.mxu0 0.0
    %179 = vmatpush1.msra.mxu0 0.0
    %180 = vmatprep.subr.mxu0 0.0
    %181 = vmatpush1.msra.mxu0 0.0
    %182 = vmatprep.subr.mxu0 0.0
    %183 = vmatpush1.msra.mxu0 0.0
    %184 = vmatprep.subr.mxu0 0.0
    %185 = vmatpush1.msra.mxu0 0.0
    %186 = vmatprep.subr.mxu0 0.0
    %187 = vmatpush1.msra.mxu0 0.0
    %188 = vmatprep.subr.mxu0 0.0
    %189 = vmatpush1.msra.mxu0 0.0
    %190 = vmatprep.subr.mxu0 0.0
    %191 = vmatpush1.msra.mxu0 0.0
    %192 = vmatprep.subr.mxu0 0.0
    %193 = vmatpush1.msra.mxu0 0.0
    %194 = vmatprep.subr.mxu0 0.0
    %195 = vmatpush1.msra.mxu0 0.0
    %196 = vmatprep.subr.mxu0 0.0
    %197 = vmatpush1.msra.mxu0 0.0
    %198 = vmatprep.subr.mxu0 0.0
    %199 = vmatpush1.msra.mxu0 0.0
    %200 = vmatprep.subr.mxu0 0.0
    %201 = vmatpush1.msra.mxu0 0.0
    %202 = vmatprep.subr.mxu0 0.0
    %203 = vmatpush1.msra.mxu0 0.0
    %204 = vmatprep.subr.mxu0 0.0
    %205 = vmatpush1.msra.mxu0 0.0
    %206 = vmatprep.subr.mxu0 0.0
    %207 = vmatpush1.msra.mxu0 0.0
    %208 = vmatprep.subr.mxu0 0.0
    %209 = vmatpush1.msra.mxu0 0.0
    %210 = vmatprep.subr.mxu0 0.0
    %211 = vmatpush1.msra.mxu0 0.0
    %212 = vmatprep.subr.mxu0 0.0
    %213 = vmatpush1.msra.mxu0 0.0
    %214 = vmatprep.subr.mxu0 0.0
    %215 = vmatpush1.msra.mxu0 0.0
    %216 = vmatprep.subr.mxu0 0.0
    %217 = vmatpush1.msra.mxu0 0.0
    %218 = vmatprep.subr.mxu0 0.0
    %219 = vmatpush1.msra.mxu0 0.0
    %220 = vmatprep.subr.mxu0 0.0
    %221 = vmatpush1.msra.mxu0 0.0
    %222 = vmatprep.subr.mxu0 0.0
    %223 = vmatpush1.msra.mxu0 0.0
    %224 = vmatprep.subr.mxu0 0.0
    %225 = vmatpush1.msra.mxu0 0.0
    %226 = vmatprep.subr.mxu0 0.0
    %227 = vmatpush1.msra.mxu0 0.0
    %228 = vmatprep.subr.mxu0 0.0
    %229 = vmatpush1.msra.mxu0 0.0
    %230 = vmatprep.subr.mxu0 0.0
    %231 = vmatpush1.msra.mxu0 0.0
    %232 = vmatprep.subr.mxu0 0.0
    %233 = vmatpush1.msra.mxu0 0.0
    %234 = vmatprep.subr.mxu0 0.0
    %235 = vmatpush1.msra.mxu0 0.0
    %236 = vmatprep.subr.mxu0 0.0
    %237 = vmatpush1.msra.mxu0 0.0
    %238 = vmatprep.subr.mxu0 0.0
    %239 = vmatpush1.msra.mxu0 0.0
    %240 = vmatprep.mubr.f32.mxu0 0.0
    %241 = vmatmul.mubr.f32.gmra.mrb[0].mxu0 %v174
    %v242 = vpop.f32.mrb[0].mxu0
    %v243 = vadd.f32 %v170, %v242
    %v244 = vpop.f32.mrb[0].mxu0
    %245 = vdwg.mxu0
    %v246 = vadd.f32 %v243, 0.0
    %v247 = vadd.f32 %v243, %v55
    %v248 = vld [vmem:[%s5] sm:$0xff]
    %v249 = vmul.f32 %v247, %v248
    %v250 = vld [vmem:[%s6] sm:$0xff]
    %v251 = vadd.f32 %v249, %v250
    %253 = vrot.lane.b32.xlu0 %v251, 2
    %v254 = vpop.permute.xlu0 %253
    %vm256 = vcmask 15360
    %v257 = vsel %vm256, 0.0, %v254
    %s258 = scalar_lea.vmem %s1, 16
    %v259 = vld [vmem:[%s258] sm:$0xff]
    %v260 = vld [vmem:[%s258 + $0x8] sm:$0xff]
    %s261 = scalar_lea.vmem %s2, 16
    %v262 = vld [vmem:[%s261] sm:$0xff]
    %v263 = vld [vmem:[%s261 + $0x8] sm:$0xff]
    %265 = vset.pattern.permute.xlu0 0
    %266 = vperm.xlu0 %265, %v262
    %v267 = vpop.permute.xlu0 %266
    %270 = vset.pattern.permute.xlu0 0
    %271 = vperm.xlu0 %270, %v263
    %v272 = vpop.permute.xlu0 %271
    %v275 = vsel %vm76, %v259, 0
    %v278 = vsel %vm76, %v260, 0
    %280 = vmatprep.subr.mxu0 0.0
    %281 = vmatpush1.msra.mxu0 %v257
    %282 = vmatprep.subr.mxu0 0.0
    %283 = vmatpush1.msra.mxu0 %v251
    %284 = vmatprep.subr.mxu0 0.0
    %285 = vmatpush1.msra.mxu0 0.0
    %286 = vmatprep.subr.mxu0 0.0
    %287 = vmatpush1.msra.mxu0 0.0
    %288 = vmatprep.subr.mxu0 0.0
    %289 = vmatpush1.msra.mxu0 0.0
    %290 = vmatprep.subr.mxu0 0.0
    %291 = vmatpush1.msra.mxu0 0.0
    %292 = vmatprep.subr.mxu0 0.0
    %293 = vmatpush1.msra.mxu0 0.0
    %294 = vmatprep.subr.mxu0 0.0
    %295 = vmatpush1.msra.mxu0 0.0
    %296 = vmatprep.subr.mxu0 0.0
    %297 = vmatpush1.msra.mxu0 0.0
    %298 = vmatprep.subr.mxu0 0.0
    %299 = vmatpush1.msra.mxu0 0.0
    %300 = vmatprep.subr.mxu0 0.0
    %301 = vmatpush1.msra.mxu0 0.0
    %302 = vmatprep.subr.mxu0 0.0
    %303 = vmatpush1.msra.mxu0 0.0
    %304 = vmatprep.subr.mxu0 0.0
    %305 = vmatpush1.msra.mxu0 0.0
    %306 = vmatprep.subr.mxu0 0.0
    %307 = vmatpush1.msra.mxu0 0.0
    %308 = vmatprep.subr.mxu0 0.0
    %309 = vmatpush1.msra.mxu0 0.0
    %310 = vmatprep.subr.mxu0 0.0
    %311 = vmatpush1.msra.mxu0 0.0
    %312 = vmatprep.subr.mxu0 0.0
    %313 = vmatpush1.msra.mxu0 0.0
    %314 = vmatprep.subr.mxu0 0.0
    %315 = vmatpush1.msra.mxu0 0.0
    %316 = vmatprep.subr.mxu0 0.0
    %317 = vmatpush1.msra.mxu0 0.0
    %318 = vmatprep.subr.mxu0 0.0
    %319 = vmatpush1.msra.mxu0 0.0
    %320 = vmatprep.subr.mxu0 0.0
    %321 = vmatpush1.msra.mxu0 0.0
    %322 = vmatprep.subr.mxu0 0.0
    %323 = vmatpush1.msra.mxu0 0.0
    %324 = vmatprep.subr.mxu0 0.0
    %325 = vmatpush1.msra.mxu0 0.0
    %326 = vmatprep.subr.mxu0 0.0
    %327 = vmatpush1.msra.mxu0 0.0
    %328 = vmatprep.subr.mxu0 0.0
    %329 = vmatpush1.msra.mxu0 0.0
    %330 = vmatprep.subr.mxu0 0.0
    %331 = vmatpush1.msra.mxu0 0.0
    %332 = vmatprep.subr.mxu0 0.0
    %333 = vmatpush1.msra.mxu0 0.0
    %334 = vmatprep.subr.mxu0 0.0
    %335 = vmatpush1.msra.mxu0 0.0
    %336 = vmatprep.subr.mxu0 0.0
    %337 = vmatpush1.msra.mxu0 0.0
    %338 = vmatprep.subr.mxu0 0.0
    %339 = vmatpush1.msra.mxu0 0.0
    %340 = vmatprep.subr.mxu0 0.0
    %341 = vmatpush1.msra.mxu0 0.0
    %342 = vmatprep.subr.mxu0 0.0
    %343 = vmatpush1.msra.mxu0 0.0
    %344 = vmatprep.mubr.f32.mxu0 0.0
    %345 = vmatmul.mubr.f32.gmra.mrb[0].mxu0 %v275
    %v346 = vpop.f32.mrb[0].mxu0
    %v347 = vadd.f32 %v267, %v346
    %v348 = vpop.f32.mrb[0].mxu0
    %349 = vmatprep.mubr.f32.mxu0 0.0
    %350 = vmatmul.mubr.f32.gmra.mrb[0].mxu0 %v278
    %v351 = vpop.f32.mrb[0].mxu0
    %v352 = vadd.f32 %v272, %v351
    %v353 = vpop.f32.mrb[0].mxu0
    %354 = vdwg.mxu0
    %v355 = vxor.u32 %v352, 2147483648
    %v356 = vmul.f32 %v355, 1.442695
    %v357 = vpow.pop %v356
    %v358 = vadd.f32 %v357, 1.0
    %v359 = vrcp.pop %v358
    %v360 = vmul.f32 1.0, %v359
    %v361 = vmul.f32 %v347, %v360
    %s362 = scalar_lea.vmem %s3, 8
    %v363 = vld [vmem:[%s362] sm:$0xff]
    %s364 = scalar_lea.vmem %s4, 8
    %v365 = vld [vmem:[%s364] sm:$0xff]
    %367 = vset.pattern.permute.xlu0 0
    %368 = vperm.xlu0 %367, %v365
    %v369 = vpop.permute.xlu0 %368
    %v372 = vsel %vm172, %v363, 0
    %374 = vmatprep.subr.mxu0 0.0
    %375 = vmatpush1.msra.mxu0 %v361
    %376 = vmatprep.subr.mxu0 0.0
    %377 = vmatpush1.msra.mxu0 0.0
    %378 = vmatprep.subr.mxu0 0.0
    %379 = vmatpush1.msra.mxu0 0.0
    %380 = vmatprep.subr.mxu0 0.0
    %381 = vmatpush1.msra.mxu0 0.0
    %382 = vmatprep.subr.mxu0 0.0
    %383 = vmatpush1.msra.mxu0 0.0
    %384 = vmatprep.subr.mxu0 0.0
    %385 = vmatpush1.msra.mxu0 0.0
    %386 = vmatprep.subr.mxu0 0.0
    %387 = vmatpush1.msra.mxu0 0.0
    %388 = vmatprep.subr.mxu0 0.0
    %389 = vmatpush1.msra.mxu0 0.0
    %390 = vmatprep.subr.mxu0 0.0
    %391 = vmatpush1.msra.mxu0 0.0
    %392 = vmatprep.subr.mxu0 0.0
    %393 = vmatpush1.msra.mxu0 0.0
    %394 = vmatprep.subr.mxu0 0.0
    %395 = vmatpush1.msra.mxu0 0.0
    %396 = vmatprep.subr.mxu0 0.0
    %397 = vmatpush1.msra.mxu0 0.0
    %398 = vmatprep.subr.mxu0 0.0
    %399 = vmatpush1.msra.mxu0 0.0
    %400 = vmatprep.subr.mxu0 0.0
    %401 = vmatpush1.msra.mxu0 0.0
    %402 = vmatprep.subr.mxu0 0.0
    %403 = vmatpush1.msra.mxu0 0.0
    %404 = vmatprep.subr.mxu0 0.0
    %405 = vmatpush1.msra.mxu0 0.0
    %406 = vmatprep.subr.mxu0 0.0
    %407 = vmatpush1.msra.mxu0 0.0
    %408 = vmatprep.subr.mxu0 0.0
    %409 = vmatpush1.msra.mxu0 0.0
    %410 = vmatprep.subr.mxu0 0.0
    %411 = vmatpush1.msra.mxu0 0.0
    %412 = vmatprep.subr.mxu0 0.0
    %413 = vmatpush1.msra.mxu0 0.0
    %414 = vmatprep.subr.mxu0 0.0
    %415 = vmatpush1.msra.mxu0 0.0
    %416 = vmatprep.subr.mxu0 0.0
    %417 = vmatpush1.msra.mxu0 0.0
    %418 = vmatprep.subr.mxu0 0.0
    %419 = vmatpush1.msra.mxu0 0.0
    %420 = vmatprep.subr.mxu0 0.0
    %421 = vmatpush1.msra.mxu0 0.0
    %422 = vmatprep.subr.mxu0 0.0
    %423 = vmatpush1.msra.mxu0 0.0
    %424 = vmatprep.subr.mxu0 0.0
    %425 = vmatpush1.msra.mxu0 0.0
    %426 = vmatprep.subr.mxu0 0.0
    %427 = vmatpush1.msra.mxu0 0.0
    %428 = vmatprep.subr.mxu0 0.0
    %429 = vmatpush1.msra.mxu0 0.0
    %430 = vmatprep.subr.mxu0 0.0
    %431 = vmatpush1.msra.mxu0 0.0
    %432 = vmatprep.subr.mxu0 0.0
    %433 = vmatpush1.msra.mxu0 0.0
    %434 = vmatprep.subr.mxu0 0.0
    %435 = vmatpush1.msra.mxu0 0.0
    %436 = vmatprep.subr.mxu0 0.0
    %437 = vmatpush1.msra.mxu0 0.0
    %438 = vmatprep.mubr.f32.mxu0 0.0
    %439 = vmatmul.mubr.f32.gmra.mrb[0].mxu0 %v372
    %v440 = vpop.f32.mrb[0].mxu0
    %v441 = vadd.f32 %v369, %v440
    %v442 = vpop.f32.mrb[0].mxu0
    %443 = vdwg.mxu0
    %v444 = vadd.f32 %v246, %v441
    %v445 = vld [vmem:[%s7] sm:$0xff]
    %v446 = vld [vmem:[%s8] sm:$0xff]
    %448 = vset.pattern.permute.xlu0 0
    %449 = vperm.xlu0 %448, %v446
    %v450 = vpop.permute.xlu0 %449
    %v453 = vsel %vm172, %v445, 0
    %455 = vmatprep.subr.mxu0 0.0
    %456 = vmatpush1.msra.mxu0 %v444
    %457 = vmatprep.subr.mxu0 0.0
    %458 = vmatpush1.msra.mxu0 0.0
    %459 = vmatprep.subr.mxu0 0.0
    %460 = vmatpush1.msra.mxu0 0.0
    %461 = vmatprep.subr.mxu0 0.0
    %462 = vmatpush1.msra.mxu0 0.0
    %463 = vmatprep.subr.mxu0 0.0
    %464 = vmatpush1.msra.mxu0 0.0
    %465 = vmatprep.subr.mxu0 0.0
    %466 = vmatpush1.msra.mxu0 0.0
    %467 = vmatprep.subr.mxu0 0.0
    %468 = vmatpush1.msra.mxu0 0.0
    %469 = vmatprep.subr.mxu0 0.0
    %470 = vmatpush1.msra.mxu0 0.0
    %471 = vmatprep.subr.mxu0 0.0
    %472 = vmatpush1.msra.mxu0 0.0
    %473 = vmatprep.subr.mxu0 0.0
    %474 = vmatpush1.msra.mxu0 0.0
    %475 = vmatprep.subr.mxu0 0.0
    %476 = vmatpush1.msra.mxu0 0.0
    %477 = vmatprep.subr.mxu0 0.0
    %478 = vmatpush1.msra.mxu0 0.0
    %479 = vmatprep.subr.mxu0 0.0
    %480 = vmatpush1.msra.mxu0 0.0
    %481 = vmatprep.subr.mxu0 0.0
    %482 = vmatpush1.msra.mxu0 0.0
    %483 = vmatprep.subr.mxu0 0.0
    %484 = vmatpush1.msra.mxu0 0.0
    %485 = vmatprep.subr.mxu0 0.0
    %486 = vmatpush1.msra.mxu0 0.0
    %487 = vmatprep.subr.mxu0 0.0
    %488 = vmatpush1.msra.mxu0 0.0
    %489 = vmatprep.subr.mxu0 0.0
    %490 = vmatpush1.msra.mxu0 0.0
    %491 = vmatprep.subr.mxu0 0.0
    %492 = vmatpush1.msra.mxu0 0.0
    %493 = vmatprep.subr.mxu0 0.0
    %494 = vmatpush1.msra.mxu0 0.0
    %495 = vmatprep.subr.mxu0 0.0
    %496 = vmatpush1.msra.mxu0 0.0
    %497 = vmatprep.subr.mxu0 0.0
    %498 = vmatpush1.msra.mxu0 0.0
    %499 = vmatprep.subr.mxu0 0.0
    %500 = vmatpush1.msra.mxu0 0.0
    %501 = vmatprep.subr.mxu0 0.0
    %502 = vmatpush1.msra.mxu0 0.0
    %503 = vmatprep.subr.mxu0 0.0
    %504 = vmatpush1.msra.mxu0 0.0
    %505 = vmatprep.subr.mxu0 0.0
    %506 = vmatpush1.msra.mxu0 0.0
    %507 = vmatprep.subr.mxu0 0.0
    %508 = vmatpush1.msra.mxu0 0.0
    %509 = vmatprep.subr.mxu0 0.0
    %510 = vmatpush1.msra.mxu0 0.0
    %511 = vmatprep.subr.mxu0 0.0
    %512 = vmatpush1.msra.mxu0 0.0
    %513 = vmatprep.subr.mxu0 0.0
    %514 = vmatpush1.msra.mxu0 0.0
    %515 = vmatprep.subr.mxu0 0.0
    %516 = vmatpush1.msra.mxu0 0.0
    %517 = vmatprep.subr.mxu0 0.0
    %518 = vmatpush1.msra.mxu0 0.0
    %519 = vmatprep.mubr.f32.mxu0 0.0
    %520 = vmatmul.mubr.f32.gmra.mrb[0].mxu0 %v453
    %v521 = vpop.f32.mrb[0].mxu0
    %v522 = vadd.f32 %v450, %v521
    %v523 = vpop.f32.mrb[0].mxu0
    %524 = vdwg.mxu0
    %v525 = vmax.f32 %v522, 0.0
    %527 = vrot.lane.b32.xlu0 %v525, 127
    %v528 = vpop.permute.xlu0 %527
    %vm530 = vcmask 334848
    %v531 = vsel %vm530, %v528, 0.0
    %v532 = vld [vmem:[%s9] sm:$0x1]
    %s533 = sld [smem:[#allocation2]]
    %v534 = vstv %s533
    %v536 = vsel %vm76, %v532, 0
    %538 = vmatprep.subr.mxu0 0.0
    %539 = vmatpush1.msra.mxu0 %v525
    %540 = vmatprep.subr.mxu0 0.0
    %541 = vmatpush1.msra.mxu0 %v531
    %542 = vmatprep.subr.mxu0 0.0
    %543 = vmatpush1.msra.mxu0 0.0
    %544 = vmatprep.subr.mxu0 0.0
    %545 = vmatpush1.msra.mxu0 0.0
    %546 = vmatprep.subr.mxu0 0.0
    %547 = vmatpush1.msra.mxu0 0.0
    %548 = vmatprep.subr.mxu0 0.0
    %549 = vmatpush1.msra.mxu0 0.0
    %550 = vmatprep.subr.mxu0 0.0
    %551 = vmatpush1.msra.mxu0 0.0
    %552 = vmatprep.subr.mxu0 0.0
    %553 = vmatpush1.msra.mxu0 0.0
    %554 = vmatprep.subr.mxu0 0.0
    %555 = vmatpush1.msra.mxu0 0.0
    %556 = vmatprep.subr.mxu0 0.0
    %557 = vmatpush1.msra.mxu0 0.0
    %558 = vmatprep.subr.mxu0 0.0
    %559 = vmatpush1.msra.mxu0 0.0
    %560 = vmatprep.subr.mxu0 0.0
    %561 = vmatpush1.msra.mxu0 0.0
    %562 = vmatprep.subr.mxu0 0.0
    %563 = vmatpush1.msra.mxu0 0.0
    %564 = vmatprep.subr.mxu0 0.0
    %565 = vmatpush1.msra.mxu0 0.0
    %566 = vmatprep.subr.mxu0 0.0
    %567 = vmatpush1.msra.mxu0 0.0
    %568 = vmatprep.subr.mxu0 0.0
    %569 = vmatpush1.msra.mxu0 0.0
    %570 = vmatprep.subr.mxu0 0.0
    %571 = vmatpush1.msra.mxu0 0.0
    %572 = vmatprep.subr.mxu0 0.0
    %573 = vmatpush1.msra.mxu0 0.0
    %574 = vmatprep.subr.mxu0 0.0
    %575 = vmatpush1.msra.mxu0 0.0
    %576 = vmatprep.subr.mxu0 0.0
    %577 = vmatpush1.msra.mxu0 0.0
    %578 = vmatprep.subr.mxu0 0.0
    %579 = vmatpush1.msra.mxu0 0.0
    %580 = vmatprep.subr.mxu0 0.0
    %581 = vmatpush1.msra.mxu0 0.0
    %582 = vmatprep.subr.mxu0 0.0
    %583 = vmatpush1.msra.mxu0 0.0
    %584 = vmatprep.subr.mxu0 0.0
    %585 = vmatpush1.msra.mxu0 0.0
    %586 = vmatprep.subr.mxu0 0.0
    %587 = vmatpush1.msra.mxu0 0.0
    %588 = vmatprep.subr.mxu0 0.0
    %589 = vmatpush1.msra.mxu0 0.0
    %590 = vmatprep.subr.mxu0 0.0
    %591 = vmatpush1.msra.mxu0 0.0
    %592 = vmatprep.subr.mxu0 0.0
    %593 = vmatpush1.msra.mxu0 0.0
    %594 = vmatprep.subr.mxu0 0.0
    %595 = vmatpush1.msra.mxu0 0.0
    %596 = vmatprep.subr.mxu0 0.0
    %597 = vmatpush1.msra.mxu0 0.0
    %598 = vmatprep.subr.mxu0 0.0
    %599 = vmatpush1.msra.mxu0 0.0
    %600 = vmatprep.subr.mxu0 0.0
    %601 = vmatpush1.msra.mxu0 0.0
    %602 = vmatprep.mubr.f32.mxu0 0.0
    %603 = vmatmul.mubr.f32.gmra.mrb[0].mxu0 %v536
    %v604 = vpop.f32.mrb[0].mxu0
    %v605 = vadd.f32 %v534, %v604
    %v606 = vpop.f32.mrb[0].mxu0
    %607 = vdwg.mxu0
    %v608 = vmax.f32 %v605, 0.0
    %v609 = vld [vmem:[%s10] sm:$0xff]
    %v610 = vld [vmem:[%s10 + $0x8] sm:$0xff]
    %v611 = vld [vmem:[%s10 + $0x10] sm:$0xff]
    %v612 = vld [vmem:[%s10 + $0x18] sm:$0xff]
    %v613 = vld [vmem:[%s10 + $0x20] sm:$0xff]
    %v614 = vld [vmem:[%s10 + $0x28] sm:$0x3]
    %s615 = sld [smem:[#allocation2 + $0x1]]
    %v616 = vstv %s615
    %vm617 = vcmask 343040
    %v619 = vsel %vm617, %v608, 0
    %vm621 = vcmask 1041408
    %v623 = vsel %vm621, %v614, 0
    %625 = vmatprep.subr.mxu0 0.0
    %626 = vmatpush1.msra.mxu0 %v609
    %627 = vmatprep.subr.mxu0 0.0
    %628 = vmatpush1.msra.mxu0 %v610
    %629 = vmatprep.subr.mxu0 0.0
    %630 = vmatpush1.msra.mxu0 %v611
    %631 = vmatprep.subr.mxu0 0.0
    %632 = vmatpush1.msra.mxu0 %v612
    %633 = vmatprep.subr.mxu0 0.0
    %634 = vmatpush1.msra.mxu0 %v613
    %635 = vmatprep.subr.mxu0 0.0
    %636 = vmatpush1.msra.mxu0 %v623
    %637 = vmatprep.subr.mxu0 0.0
    %638 = vmatpush1.msra.mxu0 0.0
    %639 = vmatprep.subr.mxu0 0.0
    %640 = vmatpush1.msra.mxu0 0.0
    %641 = vmatprep.subr.mxu0 0.0
    %642 = vmatpush1.msra.mxu0 0.0
    %643 = vmatprep.subr.mxu0 0.0
    %644 = vmatpush1.msra.mxu0 0.0
    %645 = vmatprep.subr.mxu0 0.0
    %646 = vmatpush1.msra.mxu0 0.0
    %647 = vmatprep.subr.mxu0 0.0
    %648 = vmatpush1.msra.mxu0 0.0
    %649 = vmatprep.subr.mxu0 0.0
    %650 = vmatpush1.msra.mxu0 0.0
    %651 = vmatprep.subr.mxu0 0.0
    %652 = vmatpush1.msra.mxu0 0.0
    %653 = vmatprep.subr.mxu0 0.0
    %654 = vmatpush1.msra.mxu0 0.0
    %655 = vmatprep.subr.mxu0 0.0
    %656 = vmatpush1.msra.mxu0 0.0
    %657 = vmatprep.subr.mxu0 0.0
    %658 = vmatpush1.msra.mxu0 0.0
    %659 = vmatprep.subr.mxu0 0.0
    %660 = vmatpush1.msra.mxu0 0.0
    %661 = vmatprep.subr.mxu0 0.0
    %662 = vmatpush1.msra.mxu0 0.0
    %663 = vmatprep.subr.mxu0 0.0
    %664 = vmatpush1.msra.mxu0 0.0
    %665 = vmatprep.subr.mxu0 0.0
    %666 = vmatpush1.msra.mxu0 0.0
    %667 = vmatprep.subr.mxu0 0.0
    %668 = vmatpush1.msra.mxu0 0.0
    %669 = vmatprep.subr.mxu0 0.0
    %670 = vmatpush1.msra.mxu0 0.0
    %671 = vmatprep.subr.mxu0 0.0
    %672 = vmatpush1.msra.mxu0 0.0
    %673 = vmatprep.subr.mxu0 0.0
    %674 = vmatpush1.msra.mxu0 0.0
    %675 = vmatprep.subr.mxu0 0.0
    %676 = vmatpush1.msra.mxu0 0.0
    %677 = vmatprep.subr.mxu0 0.0
    %678 = vmatpush1.msra.mxu0 0.0
    %679 = vmatprep.subr.mxu0 0.0
    %680 = vmatpush1.msra.mxu0 0.0
    %681 = vmatprep.subr.mxu0 0.0
    %682 = vmatpush1.msra.mxu0 0.0
    %683 = vmatprep.subr.mxu0 0.0
    %684 = vmatpush1.msra.mxu0 0.0
    %685 = vmatprep.subr.mxu0 0.0
    %686 = vmatpush1.msra.mxu0 0.0
    %687 = vmatprep.subr.mxu0 0.0
    %688 = vmatpush1.msra.mxu0 0.0
    %689 = vmatprep.mubr.f32.mxu0 0.0
    %690 = vmatmul.mubr.f32.gmra.mrb[0].mxu0 %v619
    %v691 = vpop.f32.mrb[0].mxu0
    %v692 = vadd.f32 %v616, %v691
    %v693 = vpop.f32.mrb[0].mxu0
    %694 = vdwg.mxu0
    %v695 = vmax.f32 %v692, 0.0
    %v696 = vxor.u32 %v695, 2147483648
    %v697 = vmul.f32 %v696, 1.442695
    %v698 = vpow.pop %v697
    %v699 = vadd.f32 %v698, 1.0
    %v700 = vrcp.pop %v699
    %v701 = vmul.f32 1.0, %v700
    %vm702 = vcmask 8192
    %703 = vst.msk [vmem:[#allocation5] sm:$0x1] %vm702, %v701
    // Predicated region
    $region54: #{wavenet_forward.1} parent=1 // pred_check
      _
    $region55: #{wavenet_forward.1} parent=1 // pred_check_branch
      %705 = sbr.rel (0) target = $region57
    $region56: #{wavenet_forward.1} parent=1 // pred_region
      %s707 = ssub.s32 16, 16
      %708 = vsyncadd [#allocation3], %s707
      %s710 = sshll.u32 [#allocation5], 4
      %s711 = int_to_ptr.vmem [resolvable:$true] %s710
      %713 = dma.vmem_to_hbm [thread:$0]  %s711, 16, %s12, [#allocation3]
    $region57: #{wavenet_forward.1} parent=1 // pred_fallthru
      _
    // Predicated region
    $region58: #{wavenet_forward.1} parent=1 // pred_check
      _
    $region59: #{wavenet_forward.1} parent=1 // pred_check_branch
      %715 = sbr.rel (0) target = $region61
    $region60: #{wavenet_forward.1} parent=1 // pred_region
      %716 = dma.done [#allocation3], 16
    $region61: #{wavenet_forward.1} parent=1 // pred_fallthru
      _
    %717 = vsyncpa [#allocation3], 1
    %718 = vsyncpa [#allocation4], 1

</llo_original>
